<compile_context>
chip_gen: v5e
topology: v5e:2x2
jax: 0.10.0
libtpu: 0.0.40
codegen_flags: <defaults>
</compile_context>

<pallas_src>
import numpy as np
import jax
import jax.numpy as jnp
from jax.experimental import pallas as pl
from jax.experimental.pallas import tpu as pltpu


# ----------------------------------------------------------------------------
# Box-filter matrix (normalized, reflect-101 borders), built at trace time.
# ----------------------------------------------------------------------------
def _box_matrix(n, radius):
    assert radius < n, "radius must be smaller than the spatial dimension"
    k = 2 * radius + 1
    mat = np.zeros((n, n), dtype=np.float32)
    for i in range(n):
        for off in range(-radius, radius + 1):
            j = i + off
            if j < 0:                      # reflect_101
                j = -j
            elif j >= n:
                j = 2 * (n - 1) - j
            mat[i, j] += 1.0
    return mat / float(k)


# ----------------------------------------------------------------------------
# Pallas kernel: per-image self-guided filter on a [gen|ir|vi] lane-concat
# slab + per-image partial L1 sum.
# ----------------------------------------------------------------------------
def _make_kernel(eps, w):
    eps = float(eps)

    def kernel(xcat_ref, bh_ref, bw_ref, out_ref):
        bh = bh_ref[...]                  # (H, H)   bf16 row (H-axis) box
        bw = bw_ref[...]                  # (3W, 3W) bf16 block-diag col box (transposed)
        x_bf = xcat_ref[0]                # (H, 3W)  bf16 [gen | ir | vi]
        x = x_bf.astype(jnp.float32)

        def box(v_bf16):                  # bf16 (H, 3W) -> f32 (H, 3W)
            t = jnp.dot(bh, v_bf16, preferred_element_type=jnp.float32)
            return jnp.dot(t.astype(jnp.bfloat16), bw,
                           preferred_element_type=jnp.float32)

        mean_i = box(x_bf)
        mean_ii = box((x * x).astype(jnp.bfloat16))
        var = jnp.maximum(mean_ii - mean_i * mean_i, 0.0)
        a = var * pl.reciprocal(var + eps, approx=True)
        b = mean_i - a * mean_i
        q = box(a.astype(jnp.bfloat16)) * x + box(b.astype(jnp.bfloat16))

        q_gen = q[:, 0:w]
        q_ir = q[:, w:2 * w]
        q_vi = q[:, 2 * w:3 * w]
        flit = jnp.maximum(jnp.abs(q_ir), jnp.abs(q_vi))
        s = jnp.sum(jnp.abs(q_gen - flit))
        # Lane-dense partial-sum block (unmasked store); wrapper reads [0,0].
        out_ref[...] = jnp.broadcast_to(s, out_ref.shape).astype(jnp.float32)

    return kernel


def make_loss_guided(radius, eps):
    """Builds the jitted forward of loss_guided_cpu(radius, eps)."""

    @jax.jit
    def loss_fn(general_img, ir_img, vi_img):
        n, c, h, w = general_img.shape
        m = n * c
        assert radius < min(h, w), "radius must be < min(H, W)"

        bh = jnp.asarray(_box_matrix(h, radius), dtype=jnp.bfloat16)
        bw_bd = jnp.asarray(
            np.kron(np.eye(3, dtype=np.float32), _box_matrix(w, radius).T),
            dtype=jnp.bfloat16)

        def imgs(x):
            return x.astype(jnp.bfloat16).reshape(m, h, w)

        # One (m, H, 3W) slab: three images of each (n, c) concatenated along W.
        xcat = jnp.concatenate(
            [imgs(general_img), imgs(ir_img), imgs(vi_img)], axis=-1)

        partial = pl.pallas_call(
            _make_kernel(eps, w),
            out_shape=jax.ShapeDtypeStruct((m, 8, 128), jnp.float32),
            grid=(m,),
            in_specs=[
                pl.BlockSpec((1, h, 3 * w), lambda i: (i, 0, 0)),   # per-m slab
                pl.BlockSpec((h, h), lambda i: (0, 0)),             # resident Bh
                pl.BlockSpec((3 * w, 3 * w), lambda i: (0, 0)),     # resident BwT (blockdiag)
            ],
            out_specs=pl.BlockSpec((1, 8, 128), lambda i: (i, 0, 0)),
            compiler_params=pltpu.CompilerParams(
                dimension_semantics=("parallel",),
                vmem_limit_bytes=32 * 1024 * 1024),
        )(xcat, bh, bw_bd)

        return jnp.sum(partial[:, 0, 0]) / (m * h * w)

    return loss_fn


# ----------------------------------------------------------------------------
# Pure-JAX reference (independent box-filter implementation) for correctness.
# ----------------------------------------------------------------------------
def _box_ref(x, radius):
    k = 2 * radius + 1
    xp = jnp.pad(x, ((0, 0), (radius, radius), (radius, radius)), mode="reflect")
    h, w = x.shape[1], x.shape[2]
    acc = jnp.zeros_like(x)
    for di in range(k):
        for dj in range(k):
            acc = acc + xp[:, di:di + h, dj:dj + w]
    return acc / float(k * k)


def _guided_ref(x, radius, eps):
    mean_i = _box_ref(x, radius)
    var = _box_ref(x * x, radius) - mean_i * mean_i
    a = var / (var + eps)
    b = mean_i - a * mean_i
    return _box_ref(a, radius) * x + _box_ref(b, radius)


def loss_guided_ref(general_img, ir_img, vi_img, radius, eps):
    n, c, h, w = general_img.shape
    shp = (n * c, h, w)
    g = _guided_ref(general_img.reshape(shp).astype(jnp.float32), radius, eps)
    i = _guided_ref(ir_img.reshape(shp).astype(jnp.float32), radius, eps)
    v = _guided_ref(vi_img.reshape(shp).astype(jnp.float32), radius, eps)
    flit = jnp.maximum(jnp.abs(i), jnp.abs(v))
    return jnp.mean(jnp.abs(g - flit))


if __name__ == "__main__":
    key = jax.random.PRNGKey(0)
    k1, k2, k3 = jax.random.split(key, 3)
    N, C, H, W = 2, 3, 32, 32
    radius, eps = 2, 1e-2

    general_img = jax.random.uniform(k1, (N, C, H, W), dtype=jnp.float32)
    ir_img = jax.random.uniform(k2, (N, C, H, W), dtype=jnp.float32)
    vi_img = jax.random.uniform(k3, (N, C, H, W), dtype=jnp.float32)

    loss_fn = make_loss_guided(radius, eps)
    out = jax.block_until_ready(loss_fn(general_img, ir_img, vi_img))
    ref = jax.block_until_ready(
        loss_guided_ref(general_img, ir_img, vi_img, radius, eps))

    o, r = float(out), float(ref)
    assert np.isfinite(o), "kernel produced a non-finite loss"
    assert abs(o - r) <= 2e-2 * max(1.0, abs(r)), f"mismatch: kernel={o} ref={r}"
    print("KERNEL_OK")
</pallas_src>

<mosaic_0001>
module attributes {stable_mosaic.version = 11 : i64} {
  func.func @kernel(%arg0: i32, %arg1: memref<1x32x96xbf16, #tpu.memory_space<vmem>>, %arg2: memref<32x32xbf16, #tpu.memory_space<vmem>>, %arg3: memref<96x96xbf16, #tpu.memory_space<vmem>>, %arg4: memref<1x8x128xf32, #tpu.memory_space<vmem>>) attributes {dimension_semantics = [#tpu.dimension_semantics<parallel>], iteration_bounds = array<i64: 6>, scalar_prefetch = 0 : i64, scratch_operands = 0 : i64, tpu.core_type = #tpu.core_type<tc>, window_params = [{transform_indices = @transform_0, window_bounds = array<i64: 1, 32, 96>}, {pipeline_mode = #tpu.pipeline_mode<synchronous>, transform_indices = @transform_1, window_bounds = array<i64: 32, 32>}, {pipeline_mode = #tpu.pipeline_mode<synchronous>, transform_indices = @transform_2, window_bounds = array<i64: 96, 96>}, {transform_indices = @transform_3, window_bounds = array<i64: 1, 8, 128>}]} {
    %c0 = arith.constant 0 : index
    %c0_0 = arith.constant 0 : index
    %0 = vector.load %arg2[%c0, %c0_0] : memref<32x32xbf16, #tpu.memory_space<vmem>>, vector<32x32xbf16>
    %c0_1 = arith.constant 0 : index
    %c0_2 = arith.constant 0 : index
    %1 = vector.load %arg3[%c0_1, %c0_2] : memref<96x96xbf16, #tpu.memory_space<vmem>>, vector<96x96xbf16>
    %c0_3 = arith.constant 0 : index
    %c0_4 = arith.constant 0 : index
    %c0_5 = arith.constant 0 : index
    %2 = vector.load %arg1[%c0_3, %c0_4, %c0_5] : memref<1x32x96xbf16, #tpu.memory_space<vmem>>, vector<1x32x96xbf16>
    %3 = vector.shape_cast %2 : vector<1x32x96xbf16> to vector<32x96xbf16>
    %4 = arith.extf %3 : vector<32x96xbf16> to vector<32x96xf32>
    %cst = arith.constant dense<0.000000e+00> : vector<32x96xf32>
    %5 = tpu.matmul %0, %3, %cst {dimension_numbers = #tpu.dot_dimension_numbers<[1], [0], [0], [1], [0, 0, 1, 1], [], []>} : vector<32x32xbf16>, vector<32x96xbf16>, vector<32x96xf32> -> vector<32x96xf32>
    %6 = arith.truncf %5 : vector<32x96xf32> to vector<32x96xbf16>
    %cst_6 = arith.constant dense<0.000000e+00> : vector<32x96xf32>
    %7 = tpu.matmul %6, %1, %cst_6 {dimension_numbers = #tpu.dot_dimension_numbers<[1], [0], [0], [1], [0, 0, 1, 1], [], []>} : vector<32x96xbf16>, vector<96x96xbf16>, vector<32x96xf32> -> vector<32x96xf32>
    %8 = arith.mulf %4, %4 : vector<32x96xf32>
    %9 = arith.truncf %8 : vector<32x96xf32> to vector<32x96xbf16>
    %cst_7 = arith.constant dense<0.000000e+00> : vector<32x96xf32>
    %10 = tpu.matmul %0, %9, %cst_7 {dimension_numbers = #tpu.dot_dimension_numbers<[1], [0], [0], [1], [0, 0, 1, 1], [], []>} : vector<32x32xbf16>, vector<32x96xbf16>, vector<32x96xf32> -> vector<32x96xf32>
    %11 = arith.truncf %10 : vector<32x96xf32> to vector<32x96xbf16>
    %cst_8 = arith.constant dense<0.000000e+00> : vector<32x96xf32>
    %12 = tpu.matmul %11, %1, %cst_8 {dimension_numbers = #tpu.dot_dimension_numbers<[1], [0], [0], [1], [0, 0, 1, 1], [], []>} : vector<32x96xbf16>, vector<96x96xbf16>, vector<32x96xf32> -> vector<32x96xf32>
    %13 = arith.mulf %7, %7 : vector<32x96xf32>
    %14 = arith.subf %12, %13 : vector<32x96xf32>
    %cst_9 = arith.constant 0.000000e+00 : f32
    %15 = vector.broadcast %cst_9 : f32 to vector<32x96xf32>
    %16 = arith.maximumf %14, %15 : vector<32x96xf32>
    %cst_10 = arith.constant 0.00999999977 : f32
    %17 = vector.broadcast %cst_10 : f32 to vector<32x96xf32>
    %18 = arith.addf %16, %17 : vector<32x96xf32>
    %19 = tpu.reciprocal %18 {approx = true} : vector<32x96xf32> -> vector<32x96xf32>
    %20 = arith.mulf %16, %19 : vector<32x96xf32>
    %21 = arith.mulf %20, %7 : vector<32x96xf32>
    %22 = arith.subf %7, %21 : vector<32x96xf32>
    %23 = arith.truncf %20 : vector<32x96xf32> to vector<32x96xbf16>
    %cst_11 = arith.constant dense<0.000000e+00> : vector<32x96xf32>
    %24 = tpu.matmul %0, %23, %cst_11 {dimension_numbers = #tpu.dot_dimension_numbers<[1], [0], [0], [1], [0, 0, 1, 1], [], []>} : vector<32x32xbf16>, vector<32x96xbf16>, vector<32x96xf32> -> vector<32x96xf32>
    %25 = arith.truncf %24 : vector<32x96xf32> to vector<32x96xbf16>
    %cst_12 = arith.constant dense<0.000000e+00> : vector<32x96xf32>
    %26 = tpu.matmul %25, %1, %cst_12 {dimension_numbers = #tpu.dot_dimension_numbers<[1], [0], [0], [1], [0, 0, 1, 1], [], []>} : vector<32x96xbf16>, vector<96x96xbf16>, vector<32x96xf32> -> vector<32x96xf32>
    %27 = arith.mulf %26, %4 : vector<32x96xf32>
    %28 = arith.truncf %22 : vector<32x96xf32> to vector<32x96xbf16>
    %cst_13 = arith.constant dense<0.000000e+00> : vector<32x96xf32>
    %29 = tpu.matmul %0, %28, %cst_13 {dimension_numbers = #tpu.dot_dimension_numbers<[1], [0], [0], [1], [0, 0, 1, 1], [], []>} : vector<32x32xbf16>, vector<32x96xbf16>, vector<32x96xf32> -> vector<32x96xf32>
    %30 = arith.truncf %29 : vector<32x96xf32> to vector<32x96xbf16>
    %cst_14 = arith.constant dense<0.000000e+00> : vector<32x96xf32>
    %31 = tpu.matmul %30, %1, %cst_14 {dimension_numbers = #tpu.dot_dimension_numbers<[1], [0], [0], [1], [0, 0, 1, 1], [], []>} : vector<32x96xbf16>, vector<96x96xbf16>, vector<32x96xf32> -> vector<32x96xf32>
    %32 = arith.addf %27, %31 : vector<32x96xf32>
    %33 = vector.extract_strided_slice %32 {offsets = [0, 0], sizes = [32, 32], strides = [1, 1]} : vector<32x96xf32> to vector<32x32xf32>
    %34 = vector.extract_strided_slice %32 {offsets = [0, 32], sizes = [32, 32], strides = [1, 1]} : vector<32x96xf32> to vector<32x32xf32>
    %35 = vector.extract_strided_slice %32 {offsets = [0, 64], sizes = [32, 32], strides = [1, 1]} : vector<32x96xf32> to vector<32x32xf32>
    %36 = math.absf %34 : vector<32x32xf32>
    %37 = math.absf %35 : vector<32x32xf32>
    %38 = arith.maximumf %36, %37 : vector<32x32xf32>
    %39 = arith.subf %33, %38 : vector<32x32xf32>
    %40 = math.absf %39 : vector<32x32xf32>
    %41 = vector.shape_cast %40 : vector<32x32xf32> to vector<1x32x32xf32>
    %cst_15 = arith.constant dense<0.000000e+00> : vector<1xf32>
    %42 = vector.multi_reduction <add>, %41, %cst_15 [1, 2] : vector<1x32x32xf32> to vector<1xf32>
    %43 = vector.shape_cast %42 : vector<1xf32> to vector<1x1x1xf32>
    %44 = vector.extract %43[0, 0, 0] : f32 from vector<1x1x1xf32>
    %45 = vector.broadcast %44 : f32 to vector<1x8x128xf32>
    %c0_16 = arith.constant 0 : index
    %c0_17 = arith.constant 0 : index
    %c0_18 = arith.constant 0 : index
    %46 = vector.load %arg4[%c0_16, %c0_17, %c0_18] : memref<1x8x128xf32, #tpu.memory_space<vmem>>, vector<1x8x128xf32>
    tpu.vector_store %arg4[%c0_16, %c0_17, %c0_18], %45 {strides = array<i32>} : memref<1x8x128xf32, #tpu.memory_space<vmem>>, vector<1x8x128xf32>,
    return
  }
  func.func @transform_0(%arg0: i32) -> (i32, i32, i32) {
    %c0_i32 = arith.constant 0 : i32
    %c0_i32_0 = arith.constant 0 : i32
    %c0_i32_1 = arith.constant 0 : i32
    return %arg0, %c0_i32, %c0_i32_0 : i32, i32, i32
  }
  func.func @transform_1(%arg0: i32) -> (i32, i32) {
    %c0_i32 = arith.constant 0 : i32
    %c0_i32_0 = arith.constant 0 : i32
    %c0_i32_1 = arith.constant 0 : i32
    return %c0_i32, %c0_i32_0 : i32, i32
  }
  func.func @transform_2(%arg0: i32) -> (i32, i32) {
    %c0_i32 = arith.constant 0 : i32
    %c0_i32_0 = arith.constant 0 : i32
    %c0_i32_1 = arith.constant 0 : i32
    return %c0_i32, %c0_i32_0 : i32, i32
  }
  func.func @transform_3(%arg0: i32) -> (i32, i32, i32) {
    %c0_i32 = arith.constant 0 : i32
    %c0_i32_0 = arith.constant 0 : i32
    %c0_i32_1 = arith.constant 0 : i32
    return %arg0, %c0_i32, %c0_i32_0 : i32, i32, i32
  }
}

</mosaic_0001>

<llo_original>
// kernel: loss_fn.1
$region0: #{loss_fn.1}
  #allocation0 [shape = 'u32[]', space=smem, size = 0x4, offset = 0x4, fixed_abs, tag = 'smem constant byte address 0x4 - core index']
  #allocation1 [shape = 'u32[72,128]{1,0:T(1,128)}', space=vmem, size = 0x9000, scoped, tag = 'internal scratch']
  %s0 = inlined_call_operand.vmem [shape: bf16[6,32,96], index: 0, kind: input, shape index: {}]
  %s1 = inlined_call_operand.vmem [shape: bf16[32,32], index: 1, kind: input, shape index: {}]
  %s2 = inlined_call_operand.vmem [shape: bf16[96,96], index: 2, kind: input, shape index: {}]
  %s3 = inlined_call_operand.vmem [shape: f32[6,8,128], index: 3, kind: output, shape index: {}]
  %s4 = sld [smem:[#allocation0]]
  $region45: #{loss_fn.1} parent=0
    _
  %s6 = ssub.s32 1, %s4
  %s7 = scalar_select 0, %s6, %s4
  loop: start=0, step=1, limit=8
  $region2: #{loss_fn.1} parent=0 // loop_pre_header
    _
  $region3: #{loss_fn.1} parent=0 // loop_header
    %s9 = sphi 0, %s13
    %p10 = scmp.ge.s32.totalorder %s9, 8
    %s19 = sphi 0, %s21
    %s22 = sphi 0, %s19
    %s23 = sphi 0, %s22
    %s39 = sphi 0, %s23
    %s43 = sphi 0, %s43
    %s45 = sphi 0, %s43
    %s46 = sphi 0, %s45
    %s60 = sphi 0, %s46
    %s64 = sphi 0, %s64
    %s66 = sphi 0, %s64
    %s67 = sphi 0, %s66
    %s81 = sphi 0, %s67
    %s87 = sphi 0, %s89
    %s90 = sphi 0, %s87
    %s91 = sphi 0, %s90
    %s107 = sphi 0, %s91
  $region4: #{loss_fn.1} parent=0 // loop_header_branch
    %12 = sbr.rel (%p10) target = $region8
  $region5: #{loss_fn.1} parent=0 // loop_body
    %s14 = ssub.s32 %s9, 1
    %s15 = ssub.s32 %s9, 2
    %s16 = sadd.s32 %s9, 1
    %s17 = ssub.s32 %s9, %s16
    %p18 = scmp.eq.s32.totalorder %s17, 0
    %s20 = sadd.s32 %s19, 1
    %s21 = scalar_select %p18, %s19, %s20
    %p24 = pneg %p18
    %p25 = scmp.eq.s32.totalorder %s9, 5
    %p26 = por %p24, %p25
    %p27 = scmp.ne.s32.totalorder %s19, %s22
    %p28 = scmp.eq.s32.totalorder %s9, 0
    %p29 = por %p27, %p28
    %p30 = scmp.ne.s32.totalorder %s19, %s22
    %p31 = scmp.eq.s32.totalorder %s14, 5
    %p32 = por %p30, %p31
    %p33 = scmp.ne.s32.totalorder %s22, %s23
    %p34 = scmp.eq.s32.totalorder %s14, 0
    %p35 = por %p33, %p34
    %p36 = scmp.ne.s32.totalorder %s22, %s23
    %p37 = scmp.eq.s32.totalorder %s15, 5
    %p38 = por %p36, %p37
    %p40 = scmp.ne.s32.totalorder %s23, %s39
    %p41 = scmp.eq.s32.totalorder %s15, 0
    %p42 = por %p40, %p41
    %s44 = sadd.s32 %s43, 1
    %p47 = scmp.eq.s32.totalorder %s9, 5
    %p48 = scmp.ne.s32.totalorder %s43, %s45
    %p49 = scmp.eq.s32.totalorder %s9, 0
    %p50 = por %p48, %p49
    %p51 = scmp.ne.s32.totalorder %s43, %s45
    %p52 = scmp.eq.s32.totalorder %s14, 5
    %p53 = por %p51, %p52
    %p54 = scmp.ne.s32.totalorder %s45, %s46
    %p55 = scmp.eq.s32.totalorder %s14, 0
    %p56 = por %p54, %p55
    %p57 = scmp.ne.s32.totalorder %s45, %s46
    %p58 = scmp.eq.s32.totalorder %s15, 5
    %p59 = por %p57, %p58
    %p61 = scmp.ne.s32.totalorder %s46, %s60
    %p62 = scmp.eq.s32.totalorder %s15, 0
    %p63 = por %p61, %p62
    %s65 = sadd.s32 %s64, 1
    %p68 = scmp.eq.s32.totalorder %s9, 5
    %p69 = scmp.ne.s32.totalorder %s64, %s66
    %p70 = scmp.eq.s32.totalorder %s9, 0
    %p71 = por %p69, %p70
    %p72 = scmp.ne.s32.totalorder %s64, %s66
    %p73 = scmp.eq.s32.totalorder %s14, 5
    %p74 = por %p72, %p73
    %p75 = scmp.ne.s32.totalorder %s66, %s67
    %p76 = scmp.eq.s32.totalorder %s14, 0
    %p77 = por %p75, %p76
    %p78 = scmp.ne.s32.totalorder %s66, %s67
    %p79 = scmp.eq.s32.totalorder %s15, 5
    %p80 = por %p78, %p79
    %p82 = scmp.ne.s32.totalorder %s67, %s81
    %p83 = scmp.eq.s32.totalorder %s15, 0
    %p84 = por %p82, %p83
    %s85 = ssub.s32 %s9, %s16
    %p86 = scmp.eq.s32.totalorder %s85, 0
    %s88 = sadd.s32 %s87, 1
    %s89 = scalar_select %p86, %s87, %s88
    %p92 = pneg %p86
    %p93 = scmp.eq.s32.totalorder %s9, 5
    %p94 = por %p92, %p93
    %p95 = scmp.ne.s32.totalorder %s87, %s90
    %p96 = scmp.eq.s32.totalorder %s9, 0
    %p97 = por %p95, %p96
    %p98 = scmp.ne.s32.totalorder %s87, %s90
    %p99 = scmp.eq.s32.totalorder %s14, 5
    %p100 = por %p98, %p99
    %p101 = scmp.ne.s32.totalorder %s90, %s91
    %p102 = scmp.eq.s32.totalorder %s14, 0
    %p103 = por %p101, %p102
    %p104 = scmp.ne.s32.totalorder %s90, %s91
    %p105 = scmp.eq.s32.totalorder %s15, 5
    %p106 = por %p104, %p105
    %p108 = scmp.ne.s32.totalorder %s91, %s107
    %p109 = scmp.eq.s32.totalorder %s15, 0
    %p110 = por %p108, %p109
    %p111 = scmp.le.s32.totalorder 1, %s9
    %p112 = scmp.lt.s32.totalorder %s9, 7
    %p113 = pnand %p111, %p112
    %p114 = pneg %p113
    // Predicated region
    $region9: #{loss_fn.1} parent=5 // pred_check
      _
    $region10: #{loss_fn.1} parent=5 // pred_check_branch
      %116 = sbr.rel (%p113) target = $region12
    $region11: #{loss_fn.1} parent=5 // pred_region
      %s117 = ssub.s32 %s9, 1
      // Predicated region
      $region13: #{loss_fn.1} parent=11 // pred_check
        %p118 = pneg %p56
      $region14: #{loss_fn.1} parent=11 // pred_check_branch
        %120 = sbr.rel (%p118) target = $region16
      $region15: #{loss_fn.1} parent=11 // pred_region
        _
      $region16: #{loss_fn.1} parent=11 // pred_fallthru
        _
      // Predicated region
      $region17: #{loss_fn.1} parent=11 // pred_check
        %p121 = pneg %p77
      $region18: #{loss_fn.1} parent=11 // pred_check_branch
        %123 = sbr.rel (%p121) target = $region20
      $region19: #{loss_fn.1} parent=11 // pred_region
        _
      $region20: #{loss_fn.1} parent=11 // pred_fallthru
        _
    $region12: #{loss_fn.1} parent=5 // pred_fallthru
      _
    %p124 = scmp.lt.s32.totalorder %s9, 6
    // Predicated region
    $region21: #{loss_fn.1} parent=5 // pred_check
      %p125 = pneg %p124
    $region22: #{loss_fn.1} parent=5 // pred_check_branch
      %127 = sbr.rel (%p125) target = $region24
    $region23: #{loss_fn.1} parent=5 // pred_region
      // Predicated region
      $region25: #{loss_fn.1} parent=23 // pred_check
        %p128 = pneg %p29
      $region26: #{loss_fn.1} parent=23 // pred_check_branch
        %130 = sbr.rel (%p128) target = $region28
      $region27: #{loss_fn.1} parent=23 // pred_region
        %p131 = scmp.lt.s32.totalorder %s9, 5
        %s132 = scalar_select %p131, %s9, 5
        %s133 = smul.addr %s132, 4
        %s134 = smul.addr %s133, 4
        %s135 = scalar_lea.vmem %s0, %s134
      $region28: #{loss_fn.1} parent=23 // pred_fallthru
        _
    $region24: #{loss_fn.1} parent=5 // pred_fallthru
      _
    %p136 = scmp.le.s32.totalorder 1, %s9
    %p137 = scmp.lt.s32.totalorder %s9, 7
    %p138 = pnand %p136, %p137
    %p139 = pneg %p138
    // Predicated region
    $region29: #{loss_fn.1} parent=5 // pred_check
      _
    $region30: #{loss_fn.1} parent=5 // pred_check_branch
      %141 = sbr.rel (%p138) target = $region32
    $region31: #{loss_fn.1} parent=5 // pred_region
      %s142 = ssub.s32 %s9, 1
      %p143 = scmp.lt.s32.totalorder %s14, 5
      %s144 = scalar_select %p143, %s14, 5
      %s145 = smul.addr %s144, 4
      %s146 = smul.addr %s145, 4
      %s147 = scalar_lea.vmem %s0, %s146
      %p148 = pneg %p35
      %p149 = pneg %p32
      %p150 = pneg %p56
      %p151 = pneg %p53
      %p152 = pneg %p77
      %p153 = pneg %p74
      %p154 = pneg %p103
      %p155 = pneg %p100
      %p156 = scmp.lt.s32.totalorder %s14, 5
      %s157 = scalar_select %p156, %s14, 5
      %s158 = smul.addr %s157, 8
      %s159 = scalar_lea.vmem %s3, %s158
      %p160 = scmp.lt.s32.totalorder %s14, 5
      %s161 = scalar_select %p160, %s14, 5
      %s162 = smul.addr %s161, 4
      %s163 = smul.addr %s162, 4
      %s164 = scalar_lea.vmem %s0, %s163
      %p165 = scmp.lt.s32.totalorder %s14, 5
      %s166 = scalar_select %p165, %s14, 5
      %s167 = smul.addr %s166, 8
      %s168 = scalar_lea.vmem %s3, %s167
      %v170 = vld [vmem:[%s1] sm:$0xf]
      %v171 = vld [vmem:[%s1 + $0x4] sm:$0xf]
      %v172 = vld [vmem:[%s1 + $0x8] sm:$0xf]
      %v173 = vld [vmem:[%s1 + $0xc] sm:$0xf]
      %v174 = vld [vmem:[%s2] sm:$0xf]
      %v175 = vld [vmem:[%s2 + $0x4] sm:$0xf]
      %v176 = vld [vmem:[%s2 + $0x8] sm:$0xf]
      %v177 = vld [vmem:[%s2 + $0xc] sm:$0xf]
      %v178 = vld [vmem:[%s2 + $0x10] sm:$0xf]
      %v179 = vld [vmem:[%s2 + $0x14] sm:$0xf]
      %v180 = vld [vmem:[%s2 + $0x18] sm:$0xf]
      %v181 = vld [vmem:[%s2 + $0x1c] sm:$0xf]
      %v182 = vld [vmem:[%s2 + $0x20] sm:$0xf]
      %v183 = vld [vmem:[%s2 + $0x24] sm:$0xf]
      %v184 = vld [vmem:[%s2 + $0x28] sm:$0xf]
      %v185 = vld [vmem:[%s2 + $0x2c] sm:$0xf]
      %v186 = vld [vmem:[%s164] sm:$0xf]
      %v187 = vld [vmem:[%s164 + $0x4] sm:$0xf]
      %v188 = vld [vmem:[%s164 + $0x8] sm:$0xf]
      %v189 = vld [vmem:[%s164 + $0xc] sm:$0xf]
      %v190 = vunpack.c.l.bf16 %v186
      %v191 = vunpack.c.l.bf16 %v187
      %v192 = vunpack.c.l.bf16 %v188
      %v193 = vunpack.c.l.bf16 %v189
      %v198 = vunpack.c.l.b16 %v170
      %v199 = vunpack.c.l.b16 %v171
      %v200 = vunpack.c.l.b16 %v172
      %v201 = vunpack.c.l.b16 %v173
      %v202 = vpack.c.b16 %v199, %v198
      %v203 = vpack.c.b16 %v201, %v200
      %v208 = vunpack.c.l.b16 %v186
      %v209 = vunpack.c.l.b16 %v187
      %v210 = vunpack.c.l.b16 %v188
      %v211 = vunpack.c.l.b16 %v189
      %v212 = vpack.c.b16 %v209, %v208
      %v213 = vpack.c.b16 %v211, %v210
      %vm216 = vcmask 261120
      %v218 = vsel %vm216, %v202, 0
      %v221 = vsel %vm216, %v203, 0
      %223 = vmatpush.bf16.msra.mxu0 0
      %224 = vmatpush.bf16.msra.mxu0 0
      %225 = vmatpush.bf16.msra.mxu0 0
      %226 = vmatpush.bf16.msra.mxu0 0
      %227 = vmatpush.bf16.msra.mxu0 0
      %228 = vmatpush.bf16.msra.mxu0 0
      %229 = vmatpush.bf16.msra.mxu0 %v213
      %230 = vmatpush.bf16.msra.mxu0 %v212
      %231 = vmatmul.bf16.gmra.mxu0 %v218
      %v232 = vpop.f32.mrf.mxu0
      %v233 = vadd.f32 0.0, %v232
      %v234 = vpop.f32.mrf.mxu0
      %v235 = vadd.f32 0.0, %v234
      %236 = vmatmul.bf16.gmra.mxu0 %v221
      %v237 = vpop.f32.mrf.mxu0
      %v238 = vadd.f32 0.0, %v237
      %v239 = vpop.f32.mrf.mxu0
      %v240 = vadd.f32 0.0, %v239
      %241 = vdwg.mxu0
      %v242 = vpack.c.bf16 %v235, %v233
      %v243 = vpack.c.bf16 %v240, %v238
      %v256 = vunpack.c.l.b16 %v174
      %v257 = vunpack.c.l.b16 %v175
      %v258 = vunpack.c.l.b16 %v176
      %v259 = vunpack.c.l.b16 %v177
      %v260 = vunpack.c.l.b16 %v178
      %v261 = vunpack.c.l.b16 %v179
      %v262 = vunpack.c.l.b16 %v180
      %v263 = vunpack.c.l.b16 %v181
      %v264 = vunpack.c.l.b16 %v182
      %v265 = vunpack.c.l.b16 %v183
      %v266 = vunpack.c.l.b16 %v184
      %v267 = vunpack.c.l.b16 %v185
      %v268 = vpack.c.b16 %v257, %v256
      %v269 = vpack.c.b16 %v259, %v258
      %v270 = vpack.c.b16 %v261, %v260
      %v271 = vpack.c.b16 %v263, %v262
      %v272 = vpack.c.b16 %v265, %v264
      %v273 = vpack.c.b16 %v267, %v266
      %vm280 = vcmask 785408
      %v282 = vsel %vm280, %v242, 0
      %v285 = vsel %vm280, %v243, 0
      %287 = vmatpush.bf16.msra.mxu0 0
      %288 = vmatpush.bf16.msra.mxu0 0
      %289 = vmatpush.bf16.msra.mxu0 %v273
      %290 = vmatpush.bf16.msra.mxu0 %v272
      %291 = vmatpush.bf16.msra.mxu0 %v271
      %292 = vmatpush.bf16.msra.mxu0 %v270
      %293 = vmatpush.bf16.msra.mxu0 %v269
      %294 = vmatpush.bf16.msra.mxu0 %v268
      %295 = vmatmul.bf16.gmra.mxu0 %v282
      %v296 = vpop.f32.mrf.mxu0
      %v297 = vadd.f32 0.0, %v296
      %v298 = vpop.f32.mrf.mxu0
      %v299 = vadd.f32 0.0, %v298
      %300 = vmatmul.bf16.gmra.mxu0 %v285
      %v301 = vpop.f32.mrf.mxu0
      %v302 = vadd.f32 0.0, %v301
      %v303 = vpop.f32.mrf.mxu0
      %v304 = vadd.f32 0.0, %v303
      %305 = vdwg.mxu0
      %v306 = vmul.f32 %v190, %v190
      %v307 = vmul.f32 %v191, %v191
      %v308 = vmul.f32 %v192, %v192
      %v309 = vmul.f32 %v193, %v193
      %v310 = vpack.c.bf16 %v307, %v306
      %v311 = vpack.c.bf16 %v309, %v308
      %312 = vmatpush.bf16.msra.mxu0 0
      %313 = vmatpush.bf16.msra.mxu0 0
      %314 = vmatpush.bf16.msra.mxu0 0
      %315 = vmatpush.bf16.msra.mxu0 0
      %316 = vmatpush.bf16.msra.mxu0 0
      %317 = vmatpush.bf16.msra.mxu0 0
      %318 = vmatpush.bf16.msra.mxu0 %v311
      %319 = vmatpush.bf16.msra.mxu0 %v310
      %320 = vmatmul.bf16.gmra.mxu0 %v218
      %v321 = vpop.f32.mrf.mxu0
      %v322 = vadd.f32 0.0, %v321
      %v323 = vpop.f32.mrf.mxu0
      %v324 = vadd.f32 0.0, %v323
      %325 = vmatmul.bf16.gmra.mxu0 %v221
      %v326 = vpop.f32.mrf.mxu0
      %v327 = vadd.f32 0.0, %v326
      %v328 = vpop.f32.mrf.mxu0
      %v329 = vadd.f32 0.0, %v328
      %330 = vdwg.mxu0
      %v331 = vpack.c.bf16 %v324, %v322
      %v332 = vpack.c.bf16 %v329, %v327
      %v334 = vsel %vm280, %v331, 0
      %v337 = vsel %vm280, %v332, 0
      %339 = vmatpush.bf16.msra.mxu0 0
      %340 = vmatpush.bf16.msra.mxu0 0
      %341 = vmatpush.bf16.msra.mxu0 %v273
      %342 = vmatpush.bf16.msra.mxu0 %v272
      %343 = vmatpush.bf16.msra.mxu0 %v271
      %344 = vmatpush.bf16.msra.mxu0 %v270
      %345 = vmatpush.bf16.msra.mxu0 %v269
      %346 = vmatpush.bf16.msra.mxu0 %v268
      %347 = vmatmul.bf16.gmra.mxu0 %v334
      %v348 = vpop.f32.mrf.mxu0
      %v349 = vadd.f32 0.0, %v348
      %v350 = vpop.f32.mrf.mxu0
      %v351 = vadd.f32 0.0, %v350
      %352 = vmatmul.bf16.gmra.mxu0 %v337
      %v353 = vpop.f32.mrf.mxu0
      %v354 = vadd.f32 0.0, %v353
      %v355 = vpop.f32.mrf.mxu0
      %v356 = vadd.f32 0.0, %v355
      %357 = vdwg.mxu0
      %v358 = vmul.f32 %v297, %v297
      %v359 = vmul.f32 %v299, %v299
      %v360 = vmul.f32 %v302, %v302
      %v361 = vmul.f32 %v304, %v304
      %v362 = vsub.f32 %v349, %v358
      %v363 = vsub.f32 %v351, %v359
      %v364 = vsub.f32 %v354, %v360
      %v365 = vsub.f32 %v356, %v361
      %v366 = vmax.f32 %v362, 0.0
      %v367 = vmax.f32 %v363, 0.0
      %v368 = vmax.f32 %v364, 0.0
      %v369 = vmax.f32 %v365, 0.0
      %v370 = vadd.f32 %v366, 0.01
      %v371 = vadd.f32 %v367, 0.01
      %v372 = vadd.f32 %v368, 0.01
      %v373 = vadd.f32 %v369, 0.01
      %v374 = vrcp.pop %v370
      %v375 = vrcp.pop %v371
      %v376 = vrcp.pop %v372
      %v377 = vrcp.pop %v373
      %v378 = vmul.f32 %v366, %v374
      %v379 = vmul.f32 %v367, %v375
      %v380 = vmul.f32 %v368, %v376
      %v381 = vmul.f32 %v369, %v377
      %v382 = vmul.f32 %v378, %v297
      %v383 = vmul.f32 %v379, %v299
      %v384 = vmul.f32 %v380, %v302
      %v385 = vmul.f32 %v381, %v304
      %v386 = vsub.f32 %v297, %v382
      %v387 = vsub.f32 %v299, %v383
      %v388 = vsub.f32 %v302, %v384
      %v389 = vsub.f32 %v304, %v385
      %v390 = vpack.c.bf16 %v379, %v378
      %v391 = vpack.c.bf16 %v381, %v380
      %392 = vmatpush.bf16.msra.mxu0 0
      %393 = vmatpush.bf16.msra.mxu0 0
      %394 = vmatpush.bf16.msra.mxu0 0
      %395 = vmatpush.bf16.msra.mxu0 0
      %396 = vmatpush.bf16.msra.mxu0 0
      %397 = vmatpush.bf16.msra.mxu0 0
      %398 = vmatpush.bf16.msra.mxu0 %v391
      %399 = vmatpush.bf16.msra.mxu0 %v390
      %400 = vmatmul.bf16.gmra.mxu0 %v218
      %v401 = vpop.f32.mrf.mxu0
      %v402 = vadd.f32 0.0, %v401
      %v403 = vpop.f32.mrf.mxu0
      %v404 = vadd.f32 0.0, %v403
      %405 = vmatmul.bf16.gmra.mxu0 %v221
      %v406 = vpop.f32.mrf.mxu0
      %v407 = vadd.f32 0.0, %v406
      %v408 = vpop.f32.mrf.mxu0
      %v409 = vadd.f32 0.0, %v408
      %410 = vdwg.mxu0
      %v411 = vpack.c.bf16 %v404, %v402
      %v412 = vpack.c.bf16 %v409, %v407
      %v414 = vsel %vm280, %v411, 0
      %v417 = vsel %vm280, %v412, 0
      %419 = vmatpush.bf16.msra.mxu0 0
      %420 = vmatpush.bf16.msra.mxu0 0
      %421 = vmatpush.bf16.msra.mxu0 %v273
      %422 = vmatpush.bf16.msra.mxu0 %v272
      %423 = vmatpush.bf16.msra.mxu0 %v271
      %424 = vmatpush.bf16.msra.mxu0 %v270
      %425 = vmatpush.bf16.msra.mxu0 %v269
      %426 = vmatpush.bf16.msra.mxu0 %v268
      %427 = vmatmul.bf16.gmra.mxu0 %v414
      %v428 = vpop.f32.mrf.mxu0
      %v429 = vadd.f32 0.0, %v428
      %v430 = vpop.f32.mrf.mxu0
      %v431 = vadd.f32 0.0, %v430
      %432 = vmatmul.bf16.gmra.mxu0 %v417
      %v433 = vpop.f32.mrf.mxu0
      %v434 = vadd.f32 0.0, %v433
      %v435 = vpop.f32.mrf.mxu0
      %v436 = vadd.f32 0.0, %v435
      %437 = vdwg.mxu0
      %v438 = vmul.f32 %v429, %v190
      %v439 = vmul.f32 %v431, %v191
      %v440 = vmul.f32 %v434, %v192
      %v441 = vmul.f32 %v436, %v193
      %v442 = vpack.c.bf16 %v387, %v386
      %v443 = vpack.c.bf16 %v389, %v388
      %444 = vmatpush.bf16.msra.mxu0 0
      %445 = vmatpush.bf16.msra.mxu0 0
      %446 = vmatpush.bf16.msra.mxu0 0
      %447 = vmatpush.bf16.msra.mxu0 0
      %448 = vmatpush.bf16.msra.mxu0 0
      %449 = vmatpush.bf16.msra.mxu0 0
      %450 = vmatpush.bf16.msra.mxu0 %v443
      %451 = vmatpush.bf16.msra.mxu0 %v442
      %452 = vmatmul.bf16.gmra.mxu0 %v218
      %v453 = vpop.f32.mrf.mxu0
      %v454 = vadd.f32 0.0, %v453
      %v455 = vpop.f32.mrf.mxu0
      %v456 = vadd.f32 0.0, %v455
      %457 = vmatmul.bf16.gmra.mxu0 %v221
      %v458 = vpop.f32.mrf.mxu0
      %v459 = vadd.f32 0.0, %v458
      %v460 = vpop.f32.mrf.mxu0
      %v461 = vadd.f32 0.0, %v460
      %462 = vdwg.mxu0
      %v463 = vpack.c.bf16 %v456, %v454
      %v464 = vpack.c.bf16 %v461, %v459
      %v466 = vsel %vm280, %v463, 0
      %v469 = vsel %vm280, %v464, 0
      %471 = vmatpush.bf16.msra.mxu0 0
      %472 = vmatpush.bf16.msra.mxu0 0
      %473 = vmatpush.bf16.msra.mxu0 %v273
      %474 = vmatpush.bf16.msra.mxu0 %v272
      %475 = vmatpush.bf16.msra.mxu0 %v271
      %476 = vmatpush.bf16.msra.mxu0 %v270
      %477 = vmatpush.bf16.msra.mxu0 %v269
      %478 = vmatpush.bf16.msra.mxu0 %v268
      %479 = vmatmul.bf16.gmra.mxu0 %v466
      %v480 = vpop.f32.mrf.mxu0
      %v481 = vadd.f32 0.0, %v480
      %v482 = vpop.f32.mrf.mxu0
      %v483 = vadd.f32 0.0, %v482
      %484 = vmatmul.bf16.gmra.mxu0 %v469
      %v485 = vpop.f32.mrf.mxu0
      %v486 = vadd.f32 0.0, %v485
      %v487 = vpop.f32.mrf.mxu0
      %v488 = vadd.f32 0.0, %v487
      %489 = vdwg.mxu0
      %v490 = vadd.f32 %v438, %v481
      %v491 = vadd.f32 %v439, %v483
      %v492 = vadd.f32 %v440, %v486
      %v493 = vadd.f32 %v441, %v488
      %v494 = vand.u32 2147483647, %v490
      %v495 = vand.u32 2147483647, %v491
      %v496 = vand.u32 2147483647, %v492
      %v497 = vand.u32 2147483647, %v493
      %502 = vrot.lane.b32.xlu0 %v494, 96
      %v503 = vpop.permute.xlu0 %502
      %504 = vrot.lane.b32.xlu0 %v495, 96
      %v505 = vpop.permute.xlu0 %504
      %506 = vrot.lane.b32.xlu0 %v496, 96
      %v507 = vpop.permute.xlu0 %506
      %508 = vrot.lane.b32.xlu0 %v497, 96
      %v509 = vpop.permute.xlu0 %508
      %v514 = vmax.f32 %v494, %v503
      %v515 = vmax.f32 %v495, %v505
      %v516 = vmax.f32 %v496, %v507
      %v517 = vmax.f32 %v497, %v509
      %522 = vrot.lane.b32.xlu0 %v514, 96
      %v523 = vpop.permute.xlu0 %522
      %524 = vrot.lane.b32.xlu0 %v515, 96
      %v525 = vpop.permute.xlu0 %524
      %526 = vrot.lane.b32.xlu0 %v516, 96
      %v527 = vpop.permute.xlu0 %526
      %528 = vrot.lane.b32.xlu0 %v517, 96
      %v529 = vpop.permute.xlu0 %528
      %v534 = vsub.f32 %v490, %v523
      %v535 = vsub.f32 %v491, %v525
      %v536 = vsub.f32 %v492, %v527
      %v537 = vsub.f32 %v493, %v529
      %v538 = vand.u32 2147483647, %v534
      %v539 = vand.u32 2147483647, %v535
      %v540 = vand.u32 2147483647, %v536
      %v541 = vand.u32 2147483647, %v537
      %v542 = vsel %vm216, %v538, 0.0
      %v543 = vsel %vm216, %v539, 0.0
      %v544 = vadd.f32 %v542, %v543
      %v545 = vsel %vm216, %v540, 0.0
      %v546 = vadd.f32 %v544, %v545
      %v547 = vsel %vm216, %v541, 0.0
      %v548 = vadd.f32 %v546, %v547
      %549 = vadd.xlane.f32.xlu0 %v548
      %v550 = vpop.xlane.xlu0 %549
      %v551 = vrot.slane %v550, 4
      %v552 = vadd.f32 %v550, %v551
      %v553 = vrot.slane %v552, 2
      %v554 = vadd.f32 %v552, %v553
      %v555 = vrot.slane %v554, 1
      %v556 = vadd.f32 %v554, %v555
      %s557 = vtos %v556
      %v558 = vstv %s557
      %559 = vst [vmem:[%s168] sm:$0xff] %v558
      %p560 = scmp.lt.s32.totalorder %s14, 5
      %s561 = scalar_select %p560, %s14, 5
      %s562 = smul.addr %s561, 8
      %s563 = scalar_lea.vmem %s3, %s562
      // Predicated region
      $region33: #{loss_fn.1} parent=31 // pred_check
        %p564 = pneg %p100
      $region34: #{loss_fn.1} parent=31 // pred_check_branch
        %566 = sbr.rel (%p564) target = $region36
      $region35: #{loss_fn.1} parent=31 // pred_region
        _
      $region36: #{loss_fn.1} parent=31 // pred_fallthru
        _
    $region32: #{loss_fn.1} parent=5 // pred_fallthru
      _
    %p567 = scmp.le.s32.totalorder 2, %s9
    // Predicated region
    $region37: #{loss_fn.1} parent=5 // pred_check
      %p568 = pneg %p567
    $region38: #{loss_fn.1} parent=5 // pred_check_branch
      %570 = sbr.rel (%p568) target = $region40
    $region39: #{loss_fn.1} parent=5 // pred_region
      %s571 = ssub.s32 %s9, 2
      // Predicated region
      $region41: #{loss_fn.1} parent=39 // pred_check
        %p572 = pneg %p106
      $region42: #{loss_fn.1} parent=39 // pred_check_branch
        %574 = sbr.rel (%p572) target = $region44
      $region43: #{loss_fn.1} parent=39 // pred_region
        %p575 = scmp.lt.s32.totalorder %s15, 5
        %s576 = scalar_select %p575, %s15, 5
        %s577 = smul.addr %s576, 8
        %s578 = scalar_lea.vmem %s3, %s577
      $region44: #{loss_fn.1} parent=39 // pred_fallthru
        _
    $region40: #{loss_fn.1} parent=5 // pred_fallthru
      _
  $region6: #{loss_fn.1} parent=0 // loop_footer
    %s13 = sadd.s32 1, %s9
  $region7: #{loss_fn.1} parent=0 // loop_footer_branch
    %8 = sbr.rel target = $region3
  $region8: #{loss_fn.1} parent=0 // loop_exit
    _

</llo_original>
